<compile_context>
chip_gen: v5e
topology: v5e:2x2
jax: 0.10.0
libtpu: 0.0.40
codegen_flags: <defaults>
</compile_context>

<pallas_src>
import math

import numpy as np
import jax
import jax.numpy as jnp
from jax.experimental import pallas as pl
from jax.experimental.pallas import tpu as pltpu


# ----------------------------------------------------------------------------
# Constant PE table (exact PyTorch __init__ loop, incl. its non-standard
# 2*i / 2*(i+1) exponents; odd d_model leaves the last column zero).
# ----------------------------------------------------------------------------
def build_pe_table(seq_len: int, d_model: int) -> jnp.ndarray:
    pe = np.zeros((seq_len, d_model), dtype=np.float32)
    for pos in range(seq_len):
        for i in range(0, d_model - 1, 2):
            pe[pos, i] = math.sin(pos / 10000 ** (2 * i / d_model))
            pe[pos, i + 1] = math.cos(pos / 10000 ** (2 * (i + 1) / d_model))
    return jnp.asarray(pe)


# ----------------------------------------------------------------------------
# Kernel: pure stream add (0.001 already folded into pe at setup time).
# pe_ref is either the same shape as x_ref (dense path) or (1, T)
# (broadcast-over-batch path); VPU sublane broadcast handles both.
# ----------------------------------------------------------------------------
def _add_kernel(x_ref, pe_ref, o_ref):
    o_ref[...] = x_ref[...] + pe_ref[...]


def _pallas_add(x2, pe2, x_block, pe_block, n_tiles, tile_axis, vmem_limit):
    if tile_axis == 0:
        idx_map = lambda i: (i, 0)      # tile over rows (dense path)
    else:
        idx_map = lambda i: (0, i)      # tile over lanes (broadcast-pe path)
    return pl.pallas_call(
        _add_kernel,
        out_shape=jax.ShapeDtypeStruct(x2.shape, x2.dtype),
        grid_spec=pltpu.PrefetchScalarGridSpec(
            num_scalar_prefetch=0,
            grid=(n_tiles,),
            in_specs=[pl.BlockSpec(x_block, idx_map),
                      pl.BlockSpec(pe_block, idx_map)],
            out_specs=pl.BlockSpec(x_block, idx_map),
        ),
        compiler_params=pltpu.CompilerParams(
            # Tiles are independent: lets v7x shard the grid across its two
            # TensorCores; harmless on single-TC v5e/v6e.
            dimension_semantics=("parallel",),
            vmem_limit_bytes=vmem_limit,
        ),
        # Donate x into the output (no second HBM allocation / defensive copy
        # when x is dead after this op).
        input_output_aliases={0: 0},
    )(x2, pe2)


# ----------------------------------------------------------------------------
# Tiling heuristics.
# ----------------------------------------------------------------------------
_MIN_PALLAS_BYTES = 256 * 1024          # below this, plain XLA add wins
_TARGET_STEP_BYTES = 4 * 1024 * 1024    # per-step HBM traffic to amortize 0.35us
_LANE_WIDTHS = (8192, 4096, 2048, 1024, 512, 256, 128)


def _vmem_params():
    try:
        cap = int(pltpu.get_tpu_info().vmem_capacity_bytes)
    except Exception:
        cap = 64 * 1024 * 1024          # conservative: v7x per-TC VMEM
    vmem_limit = min(cap // 2, 40 * 1024 * 1024)   # scoped limit, generation-aware
    vmem_budget = (3 * vmem_limit) // 4            # headroom for pipeline internals
    return vmem_limit, vmem_budget


def _choose_dense_lanes(n_elems, row_quantum):
    """Largest lane width L (multiple of 128 dividing N) that still leaves
    enough rows for dense sublanes and >= 2 grid tiles when possible."""
    for min_rows in (2 * row_quantum, row_quantum, 1):
        for lanes in _LANE_WIDTHS:
            if n_elems % lanes == 0 and n_elems // lanes >= min_rows:
                return lanes
    return None                          # N not a multiple of 128


def _choose_row_tile(R, L, itemsize, vmem_budget, target_step_bytes,
                     row_quantum, min_tiles=2):
    if R <= row_quantum:
        return R
    divs = [t for t in range(row_quantum, R, row_quantum) if R % t == 0]
    if not divs:
        return R                         # single full-array block (legal)
    step = lambda t: 3 * t * L * itemsize            # x + pe + out per step
    fit = [t for t in divs if 2 * step(t) <= vmem_budget]
    if not fit:
        fit = [min(divs)]
    multi = [t for t in fit if R // t >= min_tiles]  # keep both v7x TCs busy
    pool = multi if multi else fit
    for t in sorted(pool):
        if step(t) >= target_step_bytes:
            return t
    return max(pool)


def _choose_lane_tile(B, SD, itemsize, vmem_budget, target_step_bytes,
                      min_tiles=2):
    cands = [t for t in range(128, SD + 1, 128) if SD % t == 0]
    if not cands:
        return SD
    step = lambda t: (2 * B + 1) * t * itemsize      # x + out + pe per step
    fit = [t for t in cands if 2 * step(t) <= vmem_budget]
    if not fit:
        fit = [min(cands)]
    multi = [t for t in fit if SD // t >= min_tiles]
    pool = multi if multi else fit
    for t in sorted(pool):
        if step(t) >= target_step_bytes:
            return t
    return max(pool)


# ----------------------------------------------------------------------------
# Module wrapper.
# ----------------------------------------------------------------------------
class PositionalEncoder:
    """JAX/Pallas port of the PyTorch PositionalEncoder forward pass."""

    def __init__(self, d_model: int, seq_len: int, scale: float = 0.001):
        self.d_model = d_model
        self.seq_len = seq_len
        self.pe = build_pe_table(seq_len, d_model)          # unscaled f32 table
        self.pe_scaled = jnp.float32(scale) * self.pe       # fold 0.001 once
        self._plan_cache = {}

    # ---- one-time planning per (B, S, dtype): constant-pe prep hoisted here
    def _plan(self, B, S, D, dtype, force_pallas):
        key = (B, S, D, np.dtype(dtype).name, bool(force_pallas))
        plan = self._plan_cache.get(key)
        if plan is not None:
            return plan

        itemsize = np.dtype(dtype).itemsize
        pe_s = self.pe_scaled[:S, :].astype(dtype)          # cast to x.dtype once
        nbytes = B * S * D * itemsize
        vmem_limit, vmem_budget = _vmem_params()
        plan = None

        if nbytes < _MIN_PALLAS_BYTES and not force_pallas:
            plan = dict(mode="xla", pe=pe_s)                # dispatch overhead wins

        if plan is None and B >= 8 and (S * D) % 128 == 0:
            # Broadcast-pe path: pe kept as one (1, S*D) row, DMA'd once per
            # tile and VPU-broadcast over full batch sublanes (pe HBM traffic
            # is 1/B of x's).
            SD = S * D
            T = _choose_lane_tile(B, SD, itemsize, vmem_budget, _TARGET_STEP_BYTES)
            if 2 * (2 * B + 1) * T * itemsize <= vmem_limit:
                plan = dict(mode="pallas", pe=pe_s.reshape(1, SD),
                            x2_shape=(B, SD), x_block=(B, T), pe_block=(1, T),
                            n_tiles=SD // T, tile_axis=1, vmem_limit=vmem_limit)

        if plan is None:
            # Dense path: pre-broadcast the constant table over batch ONCE so
            # blocks are fully sublane-dense even when B < 8.
            N = B * S * D
            rq = 8 * max(1, 4 // itemsize)                  # sublane quantum
            L = _choose_dense_lanes(N, rq)
            if L is not None:
                R = N // L
                tR = _choose_row_tile(R, L, itemsize, vmem_budget,
                                      _TARGET_STEP_BYTES, rq)
                if R % tR == 0 and 6 * tR * L * itemsize <= vmem_limit:
                    pe2 = jnp.broadcast_to(pe_s[None], (B, S, D)).reshape(R, L)
                    plan = dict(mode="pallas", pe=pe2,
                                x2_shape=(R, L), x_block=(tR, L),
                                pe_block=(tR, L), n_tiles=R // tR,
                                tile_axis=0, vmem_limit=vmem_limit)

        if plan is None:
            # Shape does not tile cleanly into (8,128) vregs.
            plan = dict(mode="xla", pe=pe_s)

        plan["pe"] = jax.device_put(plan["pe"])             # commit constant once
        self._plan_cache[key] = plan
        return plan

    def __call__(self, x, *, force_pallas: bool = False):
        B, S, D = x.shape
        assert D == self.d_model, "last dim must equal d_model"
        assert S <= self.seq_len, "sequence longer than the PE table"
        plan = self._plan(B, S, D, x.dtype, force_pallas)
        if plan["mode"] == "xla":
            return x + plan["pe"][None]
        # NOTE: at scale, verify in the HLO that this reshape lowers to a
        # bitcast rather than a relayout copy (it crosses the (8,128)-tiled
        # minor dims); if a copy shows up, carry the flattened layout through
        # the surrounding ops instead of reshaping per call.
        x2 = x.reshape(plan["x2_shape"])
        out2 = _pallas_add(x2, plan["pe"], plan["x_block"], plan["pe_block"],
                           plan["n_tiles"], plan["tile_axis"], plan["vmem_limit"])
        return out2.reshape(B, S, D)


# ----------------------------------------------------------------------------
# Self-test.
# ----------------------------------------------------------------------------
if __name__ == "__main__":
    D_MODEL = 32
    TABLE_SEQ_LEN = 2048
    enc = PositionalEncoder(D_MODEL, TABLE_SEQ_LEN)

    # (name, batch, seq_len, dtype, force_pallas, atol)
    cases = [
        # toy shape implied by the module: batch=2, seq(#joints)=8, d_model=32
        ("toy-dense-single-block", 2,    8, jnp.float32,  True,  1e-6),
        # B >= 8 exercises the (1, T) broadcast-pe path
        ("bcast-pe-path",          8,   64, jnp.float32,  True,  1e-6),
        # multi-tile dense path (grid >= 2: both v7x TensorCores get work)
        ("dense-multi-tile",       2, 2048, jnp.float32,  True,  1e-6),
        # bf16: pe cast to x.dtype at plan time, 16-row sublane quantum
        ("dense-bf16",             2,  512, jnp.bfloat16, True,  5e-2),
        # tiny default path gates to the plain fused XLA add
        ("tiny-xla-fallback",      2,    8, jnp.float32,  False, 1e-6),
    ]

    keys = jax.random.split(jax.random.PRNGKey(0), len(cases))
    for (name, b, s, dtype, force, atol), k in zip(cases, keys):
        x = jax.random.normal(k, (b, s, D_MODEL), dtype=jnp.float32).astype(dtype)
        out = jax.block_until_ready(enc(x, force_pallas=force))
        ref = x.astype(jnp.float32) + jnp.float32(0.001) * enc.pe[None, :s, :]
        np.testing.assert_allclose(
            np.asarray(out.astype(jnp.float32)), np.asarray(ref),
            rtol=0.0, atol=atol, err_msg=name)

    print("KERNEL_OK")
</pallas_src>

<mosaic_0001>
module attributes {stable_mosaic.version = 11 : i64} {
  func.func @_add_kernel(%arg0: i32, %arg1: memref<1x512xf32, #tpu.memory_space<vmem>>, %arg2: memref<1x512xf32, #tpu.memory_space<vmem>>, %arg3: memref<1x512xf32, #tpu.memory_space<vmem>>) attributes {dimension_semantics = [#tpu.dimension_semantics<parallel>], iteration_bounds = array<i64: 1>, scalar_prefetch = 0 : i64, scratch_operands = 0 : i64, tpu.core_type = #tpu.core_type<tc>, window_params = [{transform_indices = @transform_0, window_bounds = array<i64: 1, 512>}, {transform_indices = @transform_1, window_bounds = array<i64: 1, 512>}, {transform_indices = @transform_2, window_bounds = array<i64: 1, 512>}]} {
    %c0 = arith.constant 0 : index
    %c0_0 = arith.constant 0 : index
    %0 = vector.load %arg1[%c0, %c0_0] : memref<1x512xf32, #tpu.memory_space<vmem>>, vector<1x512xf32>
    %c0_1 = arith.constant 0 : index
    %c0_2 = arith.constant 0 : index
    %1 = vector.load %arg2[%c0_1, %c0_2] : memref<1x512xf32, #tpu.memory_space<vmem>>, vector<1x512xf32>
    %2 = arith.addf %0, %1 : vector<1x512xf32>
    %c0_3 = arith.constant 0 : index
    %c0_4 = arith.constant 0 : index
    %3 = vector.load %arg3[%c0_3, %c0_4] : memref<1x512xf32, #tpu.memory_space<vmem>>, vector<1x512xf32>
    tpu.vector_store %arg3[%c0_3, %c0_4], %2 {strides = array<i32>} : memref<1x512xf32, #tpu.memory_space<vmem>>, vector<1x512xf32>,
    return
  }
  func.func @transform_0(%arg0: i32) -> (i32, i32) {
    %c0_i32 = arith.constant 0 : i32
    %c0_i32_0 = arith.constant 0 : i32
    return %arg0, %c0_i32 : i32, i32
  }
  func.func @transform_1(%arg0: i32) -> (i32, i32) {
    %c0_i32 = arith.constant 0 : i32
    %c0_i32_0 = arith.constant 0 : i32
    return %arg0, %c0_i32 : i32, i32
  }
  func.func @transform_2(%arg0: i32) -> (i32, i32) {
    %c0_i32 = arith.constant 0 : i32
    %c0_i32_0 = arith.constant 0 : i32
    return %arg0, %c0_i32 : i32, i32
  }
}

</mosaic_0001>

<llo_original>
// kernel: tpu_custom_call.1
$region0: #{tpu_custom_call.1}
  #allocation0 [shape = 'u32[]', space=smem, size = 0x4, offset = 0x4, fixed_abs, tag = 'smem constant byte address 0x4 - core index']
  #allocation1 [shape = 'u32[72,128]{1,0:T(1,128)}', space=vmem, size = 0x9000, scoped, tag = 'internal scratch']
  %s0 = inlined_call_operand.hbm [shape: f32[1,512], index: 0, kind: input, shape index: {}, may-alias: {0,2}]
  %s1 = inlined_call_operand.vmem [shape: f32[1,512], index: 1, kind: input, shape index: {}]
  %s2 = inlined_call_operand.hbm [shape: f32[1,512], index: 2, kind: output, shape index: {}, may-alias: {0,2}]
  %s3 = sld [smem:[#allocation0]]
  $region22: #{tpu_custom_call.1} parent=0
    _
  %s5 = ssub.s32 1, %s3
  %s6 = scalar_select 0, %s5, %s3
  $region1: #{tpu_custom_call.1} parent=0
    #allocation2 [shape = 'u8[2048]{0}', space=vmem, size = 0x800, scoped, tag = 'input window, operand 0, single buffered']
    #allocation3 [shape = 's32[1]{0}', space=sflag, size = 0x4, scoped, tag = 'scoped memory for tpu_custom_call.1']
    #allocation4 [shape = 's32[1]{0}', space=sflag, size = 0x4, scoped, tag = 'scoped memory for tpu_custom_call.1']
    #allocation5 [shape = 'u8[2048]{0}', space=vmem, size = 0x800, scoped, tag = 'output window, operand 0, single buffered']
    %7 = vsyncpa [#allocation3], 0
    %8 = vsyncpa [#allocation4], 0
    // Predicated region
    $region2: #{tpu_custom_call.1} parent=1 // pred_check
      _
    $region3: #{tpu_custom_call.1} parent=1 // pred_check_branch
      %10 = sbr.rel (0) target = $region5
    $region4: #{tpu_custom_call.1} parent=1 // pred_region
      %12 = vsyncadd [#allocation3], 0
      %s14 = sshll.u32 %s0, 4
      %s15 = int_to_ptr.hbm [resolvable:$true] %s14
      %s16 = sshll.u32 [#allocation2], 4
      %s17 = int_to_ptr.vmem [resolvable:$true] %s16
      %19 = dma.hbm_to_vmem [thread:$0]  %s15, 64, %s17, [#allocation3]
    $region5: #{tpu_custom_call.1} parent=1 // pred_fallthru
      _
    // Predicated region
    $region6: #{tpu_custom_call.1} parent=1 // pred_check
      _
    $region7: #{tpu_custom_call.1} parent=1 // pred_check_branch
      %21 = sbr.rel (0) target = $region9
    $region8: #{tpu_custom_call.1} parent=1 // pred_region
      _
    $region9: #{tpu_custom_call.1} parent=1 // pred_fallthru
      _
    // Predicated region
    $region10: #{tpu_custom_call.1} parent=1 // pred_check
      _
    $region11: #{tpu_custom_call.1} parent=1 // pred_check_branch
      %23 = sbr.rel (0) target = $region13
    $region12: #{tpu_custom_call.1} parent=1 // pred_region
      %25 = dma.done [#allocation3], 64
    $region13: #{tpu_custom_call.1} parent=1 // pred_fallthru
      _
    %v26 = vld [vmem:[#allocation2] sm:$0xf]
    %v27 = vld [vmem:[%s1] sm:$0xf]
    %v28 = vadd.f32 %v26, %v27
    %v29 = vlaneseq
    %vm30 = vcmp.ge.s32.totalorder %v29, 0
    %vm31 = vcmp.lt.s32.totalorder %v29, 512
    %vm32 = vmand %vm30, %vm31
    %33 = vst.msk [vmem:[#allocation5] sm:$0xf] %vm32, %v28
    // Predicated region
    $region14: #{tpu_custom_call.1} parent=1 // pred_check
      _
    $region15: #{tpu_custom_call.1} parent=1 // pred_check_branch
      %35 = sbr.rel (0) target = $region17
    $region16: #{tpu_custom_call.1} parent=1 // pred_region
      %37 = vsyncadd [#allocation4], 0
      %s39 = sshll.u32 [#allocation5], 4
      %s40 = int_to_ptr.vmem [resolvable:$true] %s39
      %s41 = sshll.u32 %s2, 4
      %s42 = int_to_ptr.hbm [resolvable:$true] %s41
      %44 = dma.vmem_to_hbm [thread:$0]  %s40, 64, %s42, [#allocation4]
    $region17: #{tpu_custom_call.1} parent=1 // pred_fallthru
      _
    // Predicated region
    $region18: #{tpu_custom_call.1} parent=1 // pred_check
      _
    $region19: #{tpu_custom_call.1} parent=1 // pred_check_branch
      %46 = sbr.rel (0) target = $region21
    $region20: #{tpu_custom_call.1} parent=1 // pred_region
      %48 = dma.done [#allocation4], 64
    $region21: #{tpu_custom_call.1} parent=1 // pred_fallthru
      _
    %49 = vsyncpa [#allocation3], 1
    %50 = vsyncpa [#allocation4], 1

</llo_original>
